<compile_context>
chip_gen: v7x
topology: tpu7x:2x2x1
jax: 0.10.0
libtpu: 0.0.40
codegen_flags: <defaults>
</compile_context>

<pallas_src>
import jax
import jax.numpy as jnp
from jax.experimental import pallas as pl
from jax.experimental.pallas import tpu as pltpu

HIDDEN = 32        # LSTM input size  (== module hidden_size, kept small)
OUTPUT = 32        # LSTM hidden size (== module output_size)
NUM_LAYERS = 4
LANE = 128         # lane-dense output width (conveniently == 4 * OUTPUT)

# Layers > 0 consume the previous layer's h, so the stacked-weight layout
# requires the LSTM input size to equal its hidden size.
assert HIDDEN == OUTPUT, "stacked per-layer W_ih layout requires HIDDEN == OUTPUT"


def _decoder_cell_kernel(x_ref, w_ref, b_ref, out_ref):
    """Single invocation: all layers unrolled, h carried in vregs."""
    H = OUTPUT
    h = x_ref[...]                                            # (1, HIDDEN)

    for l in range(w_ref.shape[0]):                           # static unroll
        gates = jnp.dot(h, w_ref[l],
                        preferred_element_type=jnp.float32) + b_ref[l]  # (1, 4H)
        i = jax.nn.sigmoid(gates[:, 0:H])
        # forget gate skipped: f * c0 == 0 since c0 == 0
        g = jnp.tanh(gates[:, 2 * H:3 * H])
        o = jax.nn.sigmoid(gates[:, 3 * H:4 * H])
        c = i * g
        h = o * jnp.tanh(c)

    # Lane-dense (1, 128) store; wrapper slices the first OUTPUT lanes.
    pad = jnp.zeros((1, LANE - H), jnp.float32)
    out_ref[...] = jnp.concatenate([h, pad], axis=-1)


def decoder_cell_forward(encoded_input, w_ih_t, bias):
    """encoded_input: any shape flattening to HIDDEN elements (view(1,1,-1)).
    w_ih_t: [num_layers, HIDDEN, 4*OUTPUT]  (W_ih transposed, stacked)
    bias:   [num_layers, 1, 4*OUTPUT]       (b_ih + b_hh)
    Returns (1, 1, OUTPUT), matching PyTorch decoded_output."""
    x = encoded_input.reshape(1, -1).astype(jnp.float32)      # (1, HIDDEN)
    assert x.shape[-1] == HIDDEN

    out_padded = pl.pallas_call(
        _decoder_cell_kernel,
        out_shape=jax.ShapeDtypeStruct((1, LANE), jnp.float32),
        # Whole arrays resident in VMEM; no grid, no pipelining.
        in_specs=[
            pl.BlockSpec(memory_space=pltpu.MemorySpace.VMEM),
            pl.BlockSpec(memory_space=pltpu.MemorySpace.VMEM),
            pl.BlockSpec(memory_space=pltpu.MemorySpace.VMEM),
        ],
        out_specs=pl.BlockSpec(memory_space=pltpu.MemorySpace.VMEM),
    )(x, w_ih_t, bias)

    return out_padded[:, :OUTPUT].reshape(1, 1, OUTPUT)


def decoder_cell_ref(encoded_input, w_ih_t, bias):
    """Pure-JAX reference of the same math (PyTorch LSTM, 1 step, zero state)."""
    h = encoded_input.reshape(1, -1).astype(jnp.float32)
    H = OUTPUT
    for l in range(w_ih_t.shape[0]):
        gates = h @ w_ih_t[l] + bias[l]
        i = jax.nn.sigmoid(gates[:, 0:H])
        g = jnp.tanh(gates[:, 2 * H:3 * H])
        o = jax.nn.sigmoid(gates[:, 3 * H:4 * H])
        c = i * g
        h = o * jnp.tanh(c)
    return h.reshape(1, 1, H)


if __name__ == "__main__":
    key = jax.random.PRNGKey(0)
    k_x, k_w, k_bi, k_bh = jax.random.split(key, 4)

    # Deterministic synthetic parameters (PyTorch-style uniform(-1/sqrt(H), 1/sqrt(H)))
    scale = 1.0 / float(jnp.sqrt(jnp.float32(OUTPUT)))
    w_ih = jax.random.uniform(k_w, (NUM_LAYERS, 4 * OUTPUT, HIDDEN),
                              jnp.float32, -scale, scale)
    b_ih = jax.random.uniform(k_bi, (NUM_LAYERS, 4 * OUTPUT),
                              jnp.float32, -scale, scale)
    b_hh = jax.random.uniform(k_bh, (NUM_LAYERS, 4 * OUTPUT),
                              jnp.float32, -scale, scale)
    # W_hh never participates in this forward (h0 == 0), so it is not materialized.
    # TODO(synk): self.linear / self.sigmoid are defined but unused in forward(); not implemented.

    w_ih_t = jnp.transpose(w_ih, (0, 2, 1))                   # [L, HIDDEN, 4*OUTPUT]
    bias = (b_ih + b_hh).reshape(NUM_LAYERS, 1, 4 * OUTPUT)   # [L, 1, 4*OUTPUT]

    # encoded_input: any shape that .view(1,1,-1)'s to HIDDEN elements.
    encoded_input = jax.random.normal(k_x, (4, 8), dtype=jnp.float32)

    out = decoder_cell_forward(encoded_input, w_ih_t, bias)
    out = jax.block_until_ready(out)

    ref = decoder_cell_ref(encoded_input, w_ih_t, bias)
    assert out.shape == (1, 1, OUTPUT)
    assert jnp.allclose(out, ref, atol=1e-5), "Pallas output mismatches reference"

    print("KERNEL_OK")
</pallas_src>

<mosaic_0001>
module attributes {stable_mosaic.version = 11 : i64} {
  func.func @_decoder_cell_kernel(%arg0: memref<1x32xf32, #tpu.memory_space<vmem>>, %arg1: memref<4x32x128xf32, #tpu.memory_space<vmem>>, %arg2: memref<4x1x128xf32, #tpu.memory_space<vmem>>, %arg3: memref<1x128xf32, #tpu.memory_space<vmem>>) attributes {dimension_semantics = [], scalar_prefetch = 0 : i64, scratch_operands = 0 : i64, tpu.core_type = #tpu.core_type<tc>} {
    %c0 = arith.constant 0 : index
    %c0_0 = arith.constant 0 : index
    %0 = vector.load %arg0[%c0, %c0_0] : memref<1x32xf32, #tpu.memory_space<vmem>>, vector<1x32xf32>
    %c0_1 = arith.constant 0 : index
    %c0_2 = arith.constant 0 : index
    %c0_3 = arith.constant 0 : index
    %1 = vector.load %arg1[%c0_1, %c0_2, %c0_3] : memref<4x32x128xf32, #tpu.memory_space<vmem>>, vector<1x32x128xf32>
    %2 = vector.shape_cast %1 : vector<1x32x128xf32> to vector<32x128xf32>
    %cst = arith.constant dense<0.000000e+00> : vector<1x128xf32>
    %3 = tpu.matmul %0, %2, %cst {dimension_numbers = #tpu.dot_dimension_numbers<[1], [0], [0], [1], [0, 0, 1, 1], [], []>} : vector<1x32xf32>, vector<32x128xf32>, vector<1x128xf32> -> vector<1x128xf32>
    %c0_4 = arith.constant 0 : index
    %c0_5 = arith.constant 0 : index
    %c0_6 = arith.constant 0 : index
    %4 = vector.load %arg2[%c0_4, %c0_5, %c0_6] : memref<4x1x128xf32, #tpu.memory_space<vmem>>, vector<1x1x128xf32>
    %5 = vector.shape_cast %4 : vector<1x1x128xf32> to vector<1x128xf32>
    %6 = arith.addf %3, %5 : vector<1x128xf32>
    %7 = vector.extract_strided_slice %6 {offsets = [0, 0], sizes = [1, 32], strides = [1, 1]} : vector<1x128xf32> to vector<1x32xf32>
    %8 = arith.negf %7 : vector<1x32xf32>
    %9 = math.exp %8 : vector<1x32xf32>
    %cst_7 = arith.constant 1.000000e+00 : f32
    %10 = vector.broadcast %cst_7 : f32 to vector<1x32xf32>
    %11 = arith.addf %10, %9 : vector<1x32xf32>
    %12 = arith.divf %10, %11 : vector<1x32xf32>
    %13 = vector.extract_strided_slice %6 {offsets = [0, 64], sizes = [1, 32], strides = [1, 1]} : vector<1x128xf32> to vector<1x32xf32>
    %14 = math.tanh %13 : vector<1x32xf32>
    %15 = vector.extract_strided_slice %6 {offsets = [0, 96], sizes = [1, 32], strides = [1, 1]} : vector<1x128xf32> to vector<1x32xf32>
    %16 = arith.negf %15 : vector<1x32xf32>
    %17 = math.exp %16 : vector<1x32xf32>
    %cst_8 = arith.constant 1.000000e+00 : f32
    %18 = vector.broadcast %cst_8 : f32 to vector<1x32xf32>
    %19 = arith.addf %18, %17 : vector<1x32xf32>
    %20 = arith.divf %18, %19 : vector<1x32xf32>
    %21 = arith.mulf %12, %14 : vector<1x32xf32>
    %22 = math.tanh %21 : vector<1x32xf32>
    %23 = arith.mulf %20, %22 : vector<1x32xf32>
    %c1 = arith.constant 1 : index
    %c0_9 = arith.constant 0 : index
    %c0_10 = arith.constant 0 : index
    %24 = vector.load %arg1[%c1, %c0_9, %c0_10] : memref<4x32x128xf32, #tpu.memory_space<vmem>>, vector<1x32x128xf32>
    %25 = vector.shape_cast %24 : vector<1x32x128xf32> to vector<32x128xf32>
    %cst_11 = arith.constant dense<0.000000e+00> : vector<1x128xf32>
    %26 = tpu.matmul %23, %25, %cst_11 {dimension_numbers = #tpu.dot_dimension_numbers<[1], [0], [0], [1], [0, 0, 1, 1], [], []>} : vector<1x32xf32>, vector<32x128xf32>, vector<1x128xf32> -> vector<1x128xf32>
    %c1_12 = arith.constant 1 : index
    %c0_13 = arith.constant 0 : index
    %c0_14 = arith.constant 0 : index
    %27 = vector.load %arg2[%c1_12, %c0_13, %c0_14] : memref<4x1x128xf32, #tpu.memory_space<vmem>>, vector<1x1x128xf32>
    %28 = vector.shape_cast %27 : vector<1x1x128xf32> to vector<1x128xf32>
    %29 = arith.addf %26, %28 : vector<1x128xf32>
    %30 = vector.extract_strided_slice %29 {offsets = [0, 0], sizes = [1, 32], strides = [1, 1]} : vector<1x128xf32> to vector<1x32xf32>
    %31 = arith.negf %30 : vector<1x32xf32>
    %32 = math.exp %31 : vector<1x32xf32>
    %cst_15 = arith.constant 1.000000e+00 : f32
    %33 = vector.broadcast %cst_15 : f32 to vector<1x32xf32>
    %34 = arith.addf %33, %32 : vector<1x32xf32>
    %35 = arith.divf %33, %34 : vector<1x32xf32>
    %36 = vector.extract_strided_slice %29 {offsets = [0, 64], sizes = [1, 32], strides = [1, 1]} : vector<1x128xf32> to vector<1x32xf32>
    %37 = math.tanh %36 : vector<1x32xf32>
    %38 = vector.extract_strided_slice %29 {offsets = [0, 96], sizes = [1, 32], strides = [1, 1]} : vector<1x128xf32> to vector<1x32xf32>
    %39 = arith.negf %38 : vector<1x32xf32>
    %40 = math.exp %39 : vector<1x32xf32>
    %cst_16 = arith.constant 1.000000e+00 : f32
    %41 = vector.broadcast %cst_16 : f32 to vector<1x32xf32>
    %42 = arith.addf %41, %40 : vector<1x32xf32>
    %43 = arith.divf %41, %42 : vector<1x32xf32>
    %44 = arith.mulf %35, %37 : vector<1x32xf32>
    %45 = math.tanh %44 : vector<1x32xf32>
    %46 = arith.mulf %43, %45 : vector<1x32xf32>
    %c2 = arith.constant 2 : index
    %c0_17 = arith.constant 0 : index
    %c0_18 = arith.constant 0 : index
    %47 = vector.load %arg1[%c2, %c0_17, %c0_18] : memref<4x32x128xf32, #tpu.memory_space<vmem>>, vector<1x32x128xf32>
    %48 = vector.shape_cast %47 : vector<1x32x128xf32> to vector<32x128xf32>
    %cst_19 = arith.constant dense<0.000000e+00> : vector<1x128xf32>
    %49 = tpu.matmul %46, %48, %cst_19 {dimension_numbers = #tpu.dot_dimension_numbers<[1], [0], [0], [1], [0, 0, 1, 1], [], []>} : vector<1x32xf32>, vector<32x128xf32>, vector<1x128xf32> -> vector<1x128xf32>
    %c2_20 = arith.constant 2 : index
    %c0_21 = arith.constant 0 : index
    %c0_22 = arith.constant 0 : index
    %50 = vector.load %arg2[%c2_20, %c0_21, %c0_22] : memref<4x1x128xf32, #tpu.memory_space<vmem>>, vector<1x1x128xf32>
    %51 = vector.shape_cast %50 : vector<1x1x128xf32> to vector<1x128xf32>
    %52 = arith.addf %49, %51 : vector<1x128xf32>
    %53 = vector.extract_strided_slice %52 {offsets = [0, 0], sizes = [1, 32], strides = [1, 1]} : vector<1x128xf32> to vector<1x32xf32>
    %54 = arith.negf %53 : vector<1x32xf32>
    %55 = math.exp %54 : vector<1x32xf32>
    %cst_23 = arith.constant 1.000000e+00 : f32
    %56 = vector.broadcast %cst_23 : f32 to vector<1x32xf32>
    %57 = arith.addf %56, %55 : vector<1x32xf32>
    %58 = arith.divf %56, %57 : vector<1x32xf32>
    %59 = vector.extract_strided_slice %52 {offsets = [0, 64], sizes = [1, 32], strides = [1, 1]} : vector<1x128xf32> to vector<1x32xf32>
    %60 = math.tanh %59 : vector<1x32xf32>
    %61 = vector.extract_strided_slice %52 {offsets = [0, 96], sizes = [1, 32], strides = [1, 1]} : vector<1x128xf32> to vector<1x32xf32>
    %62 = arith.negf %61 : vector<1x32xf32>
    %63 = math.exp %62 : vector<1x32xf32>
    %cst_24 = arith.constant 1.000000e+00 : f32
    %64 = vector.broadcast %cst_24 : f32 to vector<1x32xf32>
    %65 = arith.addf %64, %63 : vector<1x32xf32>
    %66 = arith.divf %64, %65 : vector<1x32xf32>
    %67 = arith.mulf %58, %60 : vector<1x32xf32>
    %68 = math.tanh %67 : vector<1x32xf32>
    %69 = arith.mulf %66, %68 : vector<1x32xf32>
    %c3 = arith.constant 3 : index
    %c0_25 = arith.constant 0 : index
    %c0_26 = arith.constant 0 : index
    %70 = vector.load %arg1[%c3, %c0_25, %c0_26] : memref<4x32x128xf32, #tpu.memory_space<vmem>>, vector<1x32x128xf32>
    %71 = vector.shape_cast %70 : vector<1x32x128xf32> to vector<32x128xf32>
    %cst_27 = arith.constant dense<0.000000e+00> : vector<1x128xf32>
    %72 = tpu.matmul %69, %71, %cst_27 {dimension_numbers = #tpu.dot_dimension_numbers<[1], [0], [0], [1], [0, 0, 1, 1], [], []>} : vector<1x32xf32>, vector<32x128xf32>, vector<1x128xf32> -> vector<1x128xf32>
    %c3_28 = arith.constant 3 : index
    %c0_29 = arith.constant 0 : index
    %c0_30 = arith.constant 0 : index
    %73 = vector.load %arg2[%c3_28, %c0_29, %c0_30] : memref<4x1x128xf32, #tpu.memory_space<vmem>>, vector<1x1x128xf32>
    %74 = vector.shape_cast %73 : vector<1x1x128xf32> to vector<1x128xf32>
    %75 = arith.addf %72, %74 : vector<1x128xf32>
    %76 = vector.extract_strided_slice %75 {offsets = [0, 0], sizes = [1, 32], strides = [1, 1]} : vector<1x128xf32> to vector<1x32xf32>
    %77 = arith.negf %76 : vector<1x32xf32>
    %78 = math.exp %77 : vector<1x32xf32>
    %cst_31 = arith.constant 1.000000e+00 : f32
    %79 = vector.broadcast %cst_31 : f32 to vector<1x32xf32>
    %80 = arith.addf %79, %78 : vector<1x32xf32>
    %81 = arith.divf %79, %80 : vector<1x32xf32>
    %82 = vector.extract_strided_slice %75 {offsets = [0, 64], sizes = [1, 32], strides = [1, 1]} : vector<1x128xf32> to vector<1x32xf32>
    %83 = math.tanh %82 : vector<1x32xf32>
    %84 = vector.extract_strided_slice %75 {offsets = [0, 96], sizes = [1, 32], strides = [1, 1]} : vector<1x128xf32> to vector<1x32xf32>
    %85 = arith.negf %84 : vector<1x32xf32>
    %86 = math.exp %85 : vector<1x32xf32>
    %cst_32 = arith.constant 1.000000e+00 : f32
    %87 = vector.broadcast %cst_32 : f32 to vector<1x32xf32>
    %88 = arith.addf %87, %86 : vector<1x32xf32>
    %89 = arith.divf %87, %88 : vector<1x32xf32>
    %90 = arith.mulf %81, %83 : vector<1x32xf32>
    %91 = math.tanh %90 : vector<1x32xf32>
    %92 = arith.mulf %89, %91 : vector<1x32xf32>
    %cst_33 = arith.constant 0.000000e+00 : f32
    %93 = vector.broadcast %cst_33 : f32 to vector<1x96xf32>
    %94 = tpu.concatenate %92, %93 in 1 : vector<1x32xf32>, vector<1x96xf32> -> vector<1x128xf32>
    %c0_34 = arith.constant 0 : index
    %c0_35 = arith.constant 0 : index
    %95 = vector.load %arg3[%c0_34, %c0_35] : memref<1x128xf32, #tpu.memory_space<vmem>>, vector<1x128xf32>
    tpu.vector_store %arg3[%c0_34, %c0_35], %94 {strides = array<i32>} : memref<1x128xf32, #tpu.memory_space<vmem>>, vector<1x128xf32>,
    return
  }
}

</mosaic_0001>

<llo_original>
// kernel: tpu_custom_call.1
$region0: #{tpu_custom_call.1}
  #allocation0 [shape = 'u32[]', space=smem, size = 0x4, offset = 0x4, fixed_abs, tag = 'smem constant byte address 0x4 - core index']
  #allocation1 [shape = 'u32[144,128]{1,0:T(1,128)}', space=vmem, size = 0x12000, scoped, tag = 'internal scratch']
  %s0 = inlined_call_operand.hbm [shape: f32[1,32], index: 0, kind: input, shape index: {}]
  %s1 = inlined_call_operand.hbm [shape: f32[4,32,128], index: 1, kind: input, shape index: {}]
  %s2 = inlined_call_operand.vmem [shape: f32[4,1,128], index: 2, kind: input, shape index: {}]
  %s3 = inlined_call_operand.hbm [shape: f32[1,128], index: 3, kind: output, shape index: {}]
  %s4 = sld [smem:[#allocation0]]
  $region30: #{tpu_custom_call.1} parent=0
    _
  %s6 = ssub.s32 1, %s4
  %s7 = scalar_select 0, %s6, %s4
  $region1: #{tpu_custom_call.1} parent=0
    #allocation2 [shape = 'u8[512]{0}', space=vmem, size = 0x400, scoped, tag = 'input window, operand 0, single buffered']
    #allocation3 [shape = 's32[1]{0}', space=sflag, size = 0x4, scoped, tag = 'scoped memory for tpu_custom_call.1']
    #allocation4 [shape = 's32[1]{0}', space=sflag, size = 0x4, scoped, tag = 'scoped memory for tpu_custom_call.1']
    #allocation5 [shape = 'u8[65536]{0}', space=vmem, size = 0x10000, scoped, tag = 'input window, operand 1, single buffered']
    #allocation6 [shape = 's32[1]{0}', space=sflag, size = 0x4, scoped, tag = 'scoped memory for tpu_custom_call.1']
    #allocation7 [shape = 'u8[512]{0}', space=vmem, size = 0x400, scoped, tag = 'output window, operand 0, single buffered']
    %8 = vsyncpa [#allocation3], 0
    %9 = vsyncpa [#allocation6], 0
    %10 = vsyncpa [#allocation4], 0
    // Predicated region
    $region2: #{tpu_custom_call.1} parent=1 // pred_check
      _
    $region3: #{tpu_custom_call.1} parent=1 // pred_check_branch
      %12 = sbr.rel (0) target = $region5
    $region4: #{tpu_custom_call.1} parent=1 // pred_region
      %s14 = ssub.s32 16, 16
      %15 = vsyncadd [#allocation3], %s14
      %s17 = sshll.u32 [#allocation2], 4
      %s18 = int_to_ptr.vmem [resolvable:$true] %s17
      %20 = dma.hbm_to_vmem [thread:$0]  %s0, 16, %s18, [#allocation3]
    $region5: #{tpu_custom_call.1} parent=1 // pred_fallthru
      _
    // Predicated region
    $region6: #{tpu_custom_call.1} parent=1 // pred_check
      _
    $region7: #{tpu_custom_call.1} parent=1 // pred_check_branch
      %22 = sbr.rel (0) target = $region9
    $region8: #{tpu_custom_call.1} parent=1 // pred_region
      %s24 = ssub.s32 2048, 2048
      %25 = vsyncadd [#allocation6], %s24
      %s26 = sshll.u32 [#allocation5], 4
      %s27 = int_to_ptr.vmem [resolvable:$true] %s26
      %32 = dma.hbm_to_vmem [thread:$0]  %s1, 2048, %s27, [#allocation6], 128, 128, 8
    $region9: #{tpu_custom_call.1} parent=1 // pred_fallthru
      _
    // Predicated region
    $region10: #{tpu_custom_call.1} parent=1 // pred_check
      _
    $region11: #{tpu_custom_call.1} parent=1 // pred_check_branch
      %34 = sbr.rel (0) target = $region13
    $region12: #{tpu_custom_call.1} parent=1 // pred_region
      _
    $region13: #{tpu_custom_call.1} parent=1 // pred_fallthru
      _
    // Predicated region
    $region14: #{tpu_custom_call.1} parent=1 // pred_check
      _
    $region15: #{tpu_custom_call.1} parent=1 // pred_check_branch
      %36 = sbr.rel (0) target = $region17
    $region16: #{tpu_custom_call.1} parent=1 // pred_region
      %37 = dma.done [#allocation3], 16
    $region17: #{tpu_custom_call.1} parent=1 // pred_fallthru
      _
    // Predicated region
    $region18: #{tpu_custom_call.1} parent=1 // pred_check
      _
    $region19: #{tpu_custom_call.1} parent=1 // pred_check_branch
      %39 = sbr.rel (0) target = $region21
    $region20: #{tpu_custom_call.1} parent=1 // pred_region
      %40 = dma.done [#allocation6], 2048
    $region21: #{tpu_custom_call.1} parent=1 // pred_fallthru
      _
    %v41 = vld [vmem:[#allocation2] sm:$0x1]
    %v42 = vld [vmem:[#allocation5] sm:$0xff]
    %v43 = vld [vmem:[#allocation5 + $0x8] sm:$0xff]
    %v44 = vld [vmem:[#allocation5 + $0x10] sm:$0xff]
    %v45 = vld [vmem:[#allocation5 + $0x18] sm:$0xff]
    %v46 = vld [vmem:[%s2] sm:$0x1]
    %vm47 = vcmask 261120
    %v49 = vsel %vm47, %v41, 0
    %51 = vmatprep.subr.mxu0 0.0
    %52 = vmatpush1.msra.mxu0 %v42
    %53 = vmatprep.subr.mxu0 0.0
    %54 = vmatpush1.msra.mxu0 %v43
    %55 = vmatprep.subr.mxu0 0.0
    %56 = vmatpush1.msra.mxu0 %v44
    %57 = vmatprep.subr.mxu0 0.0
    %58 = vmatpush1.msra.mxu0 %v45
    %59 = vmatprep.subr.mxu0 0.0
    %60 = vmatpush1.msra.mxu0 0.0
    %61 = vmatprep.subr.mxu0 0.0
    %62 = vmatpush1.msra.mxu0 0.0
    %63 = vmatprep.subr.mxu0 0.0
    %64 = vmatpush1.msra.mxu0 0.0
    %65 = vmatprep.subr.mxu0 0.0
    %66 = vmatpush1.msra.mxu0 0.0
    %67 = vmatprep.subr.mxu0 0.0
    %68 = vmatpush1.msra.mxu0 0.0
    %69 = vmatprep.subr.mxu0 0.0
    %70 = vmatpush1.msra.mxu0 0.0
    %71 = vmatprep.subr.mxu0 0.0
    %72 = vmatpush1.msra.mxu0 0.0
    %73 = vmatprep.subr.mxu0 0.0
    %74 = vmatpush1.msra.mxu0 0.0
    %75 = vmatprep.subr.mxu0 0.0
    %76 = vmatpush1.msra.mxu0 0.0
    %77 = vmatprep.subr.mxu0 0.0
    %78 = vmatpush1.msra.mxu0 0.0
    %79 = vmatprep.subr.mxu0 0.0
    %80 = vmatpush1.msra.mxu0 0.0
    %81 = vmatprep.subr.mxu0 0.0
    %82 = vmatpush1.msra.mxu0 0.0
    %83 = vmatprep.subr.mxu0 0.0
    %84 = vmatpush1.msra.mxu0 0.0
    %85 = vmatprep.subr.mxu0 0.0
    %86 = vmatpush1.msra.mxu0 0.0
    %87 = vmatprep.subr.mxu0 0.0
    %88 = vmatpush1.msra.mxu0 0.0
    %89 = vmatprep.subr.mxu0 0.0
    %90 = vmatpush1.msra.mxu0 0.0
    %91 = vmatprep.subr.mxu0 0.0
    %92 = vmatpush1.msra.mxu0 0.0
    %93 = vmatprep.subr.mxu0 0.0
    %94 = vmatpush1.msra.mxu0 0.0
    %95 = vmatprep.subr.mxu0 0.0
    %96 = vmatpush1.msra.mxu0 0.0
    %97 = vmatprep.subr.mxu0 0.0
    %98 = vmatpush1.msra.mxu0 0.0
    %99 = vmatprep.subr.mxu0 0.0
    %100 = vmatpush1.msra.mxu0 0.0
    %101 = vmatprep.subr.mxu0 0.0
    %102 = vmatpush1.msra.mxu0 0.0
    %103 = vmatprep.subr.mxu0 0.0
    %104 = vmatpush1.msra.mxu0 0.0
    %105 = vmatprep.subr.mxu0 0.0
    %106 = vmatpush1.msra.mxu0 0.0
    %107 = vmatprep.subr.mxu0 0.0
    %108 = vmatpush1.msra.mxu0 0.0
    %109 = vmatprep.subr.mxu0 0.0
    %110 = vmatpush1.msra.mxu0 0.0
    %111 = vmatprep.subr.mxu0 0.0
    %112 = vmatpush1.msra.mxu0 0.0
    %113 = vmatprep.subr.mxu0 0.0
    %114 = vmatpush1.msra.mxu0 0.0
    %115 = vmatprep.mubr.f32.mxu0 0.0
    %116 = vmatmul.mubr.f32.gmra.mrb[0].mxu0 %v49
    %v117 = vpop.f32.mrb[0].mxu0
    %v118 = vadd.f32 %v46, %v117
    %v119 = vpop.f32.mrb[0].mxu0
    %120 = vdwg.mxu0
    %v121 = vxor.u32 %v118, 2147483648
    %v122 = vmul.f32 %v121, 1.442695
    %v123 = vpow.pop %v122
    %v124 = vadd.f32 %v123, 1.0
    %v125 = vrcp.pop %v124
    %v126 = vmul.f32 1.0, %v125
    %v127 = vtanh.pop %v118
    %129 = vrot.lane.b32.xlu0 %v127, 64
    %v130 = vpop.permute.xlu0 %129
    %v132 = vmul.f32 %v126, %v130
    %v133 = vtanh.pop %v132
    %135 = vrot.lane.b32.xlu0 %v133, 96
    %v136 = vpop.permute.xlu0 %135
    %v138 = vmul.f32 %v126, %v136
    %s139 = scalar_lea.vmem [#allocation5], 32
    %v140 = vld [vmem:[%s139] sm:$0xff]
    %v141 = vld [vmem:[%s139 + $0x8] sm:$0xff]
    %v142 = vld [vmem:[%s139 + $0x10] sm:$0xff]
    %v143 = vld [vmem:[%s139 + $0x18] sm:$0xff]
    %s144 = scalar_lea.vmem %s2, 1
    %v145 = vld [vmem:[%s144] sm:$0x1]
    %147 = vrot.lane.b32.xlu0 %v138, 32
    %v148 = vpop.permute.xlu0 %147
    %v149 = vsel %vm47, %v148, 0
    %151 = vmatprep.subr.mxu0 0.0
    %152 = vmatpush1.msra.mxu0 %v140
    %153 = vmatprep.subr.mxu0 0.0
    %154 = vmatpush1.msra.mxu0 %v141
    %155 = vmatprep.subr.mxu0 0.0
    %156 = vmatpush1.msra.mxu0 %v142
    %157 = vmatprep.subr.mxu0 0.0
    %158 = vmatpush1.msra.mxu0 %v143
    %159 = vmatprep.subr.mxu0 0.0
    %160 = vmatpush1.msra.mxu0 0.0
    %161 = vmatprep.subr.mxu0 0.0
    %162 = vmatpush1.msra.mxu0 0.0
    %163 = vmatprep.subr.mxu0 0.0
    %164 = vmatpush1.msra.mxu0 0.0
    %165 = vmatprep.subr.mxu0 0.0
    %166 = vmatpush1.msra.mxu0 0.0
    %167 = vmatprep.subr.mxu0 0.0
    %168 = vmatpush1.msra.mxu0 0.0
    %169 = vmatprep.subr.mxu0 0.0
    %170 = vmatpush1.msra.mxu0 0.0
    %171 = vmatprep.subr.mxu0 0.0
    %172 = vmatpush1.msra.mxu0 0.0
    %173 = vmatprep.subr.mxu0 0.0
    %174 = vmatpush1.msra.mxu0 0.0
    %175 = vmatprep.subr.mxu0 0.0
    %176 = vmatpush1.msra.mxu0 0.0
    %177 = vmatprep.subr.mxu0 0.0
    %178 = vmatpush1.msra.mxu0 0.0
    %179 = vmatprep.subr.mxu0 0.0
    %180 = vmatpush1.msra.mxu0 0.0
    %181 = vmatprep.subr.mxu0 0.0
    %182 = vmatpush1.msra.mxu0 0.0
    %183 = vmatprep.subr.mxu0 0.0
    %184 = vmatpush1.msra.mxu0 0.0
    %185 = vmatprep.subr.mxu0 0.0
    %186 = vmatpush1.msra.mxu0 0.0
    %187 = vmatprep.subr.mxu0 0.0
    %188 = vmatpush1.msra.mxu0 0.0
    %189 = vmatprep.subr.mxu0 0.0
    %190 = vmatpush1.msra.mxu0 0.0
    %191 = vmatprep.subr.mxu0 0.0
    %192 = vmatpush1.msra.mxu0 0.0
    %193 = vmatprep.subr.mxu0 0.0
    %194 = vmatpush1.msra.mxu0 0.0
    %195 = vmatprep.subr.mxu0 0.0
    %196 = vmatpush1.msra.mxu0 0.0
    %197 = vmatprep.subr.mxu0 0.0
    %198 = vmatpush1.msra.mxu0 0.0
    %199 = vmatprep.subr.mxu0 0.0
    %200 = vmatpush1.msra.mxu0 0.0
    %201 = vmatprep.subr.mxu0 0.0
    %202 = vmatpush1.msra.mxu0 0.0
    %203 = vmatprep.subr.mxu0 0.0
    %204 = vmatpush1.msra.mxu0 0.0
    %205 = vmatprep.subr.mxu0 0.0
    %206 = vmatpush1.msra.mxu0 0.0
    %207 = vmatprep.subr.mxu0 0.0
    %208 = vmatpush1.msra.mxu0 0.0
    %209 = vmatprep.subr.mxu0 0.0
    %210 = vmatpush1.msra.mxu0 0.0
    %211 = vmatprep.subr.mxu0 0.0
    %212 = vmatpush1.msra.mxu0 0.0
    %213 = vmatprep.subr.mxu0 0.0
    %214 = vmatpush1.msra.mxu0 0.0
    %215 = vmatprep.mubr.f32.mxu0 0.0
    %216 = vmatmul.mubr.f32.gmra.mrb[0].mxu0 %v149
    %v217 = vpop.f32.mrb[0].mxu0
    %v218 = vadd.f32 %v145, %v217
    %v219 = vpop.f32.mrb[0].mxu0
    %220 = vdwg.mxu0
    %v221 = vxor.u32 %v218, 2147483648
    %v222 = vmul.f32 %v221, 1.442695
    %v223 = vpow.pop %v222
    %v224 = vadd.f32 %v223, 1.0
    %v225 = vrcp.pop %v224
    %v226 = vmul.f32 1.0, %v225
    %v227 = vtanh.pop %v218
    %229 = vrot.lane.b32.xlu0 %v227, 64
    %v230 = vpop.permute.xlu0 %229
    %v232 = vmul.f32 %v226, %v230
    %v233 = vtanh.pop %v232
    %235 = vrot.lane.b32.xlu0 %v233, 96
    %v236 = vpop.permute.xlu0 %235
    %v238 = vmul.f32 %v226, %v236
    %s239 = scalar_lea.vmem [#allocation5], 64
    %v240 = vld [vmem:[%s239] sm:$0xff]
    %v241 = vld [vmem:[%s239 + $0x8] sm:$0xff]
    %v242 = vld [vmem:[%s239 + $0x10] sm:$0xff]
    %v243 = vld [vmem:[%s239 + $0x18] sm:$0xff]
    %s244 = scalar_lea.vmem %s2, 2
    %v245 = vld [vmem:[%s244] sm:$0x1]
    %247 = vrot.lane.b32.xlu0 %v238, 32
    %v248 = vpop.permute.xlu0 %247
    %v249 = vsel %vm47, %v248, 0
    %251 = vmatprep.subr.mxu0 0.0
    %252 = vmatpush1.msra.mxu0 %v240
    %253 = vmatprep.subr.mxu0 0.0
    %254 = vmatpush1.msra.mxu0 %v241
    %255 = vmatprep.subr.mxu0 0.0
    %256 = vmatpush1.msra.mxu0 %v242
    %257 = vmatprep.subr.mxu0 0.0
    %258 = vmatpush1.msra.mxu0 %v243
    %259 = vmatprep.subr.mxu0 0.0
    %260 = vmatpush1.msra.mxu0 0.0
    %261 = vmatprep.subr.mxu0 0.0
    %262 = vmatpush1.msra.mxu0 0.0
    %263 = vmatprep.subr.mxu0 0.0
    %264 = vmatpush1.msra.mxu0 0.0
    %265 = vmatprep.subr.mxu0 0.0
    %266 = vmatpush1.msra.mxu0 0.0
    %267 = vmatprep.subr.mxu0 0.0
    %268 = vmatpush1.msra.mxu0 0.0
    %269 = vmatprep.subr.mxu0 0.0
    %270 = vmatpush1.msra.mxu0 0.0
    %271 = vmatprep.subr.mxu0 0.0
    %272 = vmatpush1.msra.mxu0 0.0
    %273 = vmatprep.subr.mxu0 0.0
    %274 = vmatpush1.msra.mxu0 0.0
    %275 = vmatprep.subr.mxu0 0.0
    %276 = vmatpush1.msra.mxu0 0.0
    %277 = vmatprep.subr.mxu0 0.0
    %278 = vmatpush1.msra.mxu0 0.0
    %279 = vmatprep.subr.mxu0 0.0
    %280 = vmatpush1.msra.mxu0 0.0
    %281 = vmatprep.subr.mxu0 0.0
    %282 = vmatpush1.msra.mxu0 0.0
    %283 = vmatprep.subr.mxu0 0.0
    %284 = vmatpush1.msra.mxu0 0.0
    %285 = vmatprep.subr.mxu0 0.0
    %286 = vmatpush1.msra.mxu0 0.0
    %287 = vmatprep.subr.mxu0 0.0
    %288 = vmatpush1.msra.mxu0 0.0
    %289 = vmatprep.subr.mxu0 0.0
    %290 = vmatpush1.msra.mxu0 0.0
    %291 = vmatprep.subr.mxu0 0.0
    %292 = vmatpush1.msra.mxu0 0.0
    %293 = vmatprep.subr.mxu0 0.0
    %294 = vmatpush1.msra.mxu0 0.0
    %295 = vmatprep.subr.mxu0 0.0
    %296 = vmatpush1.msra.mxu0 0.0
    %297 = vmatprep.subr.mxu0 0.0
    %298 = vmatpush1.msra.mxu0 0.0
    %299 = vmatprep.subr.mxu0 0.0
    %300 = vmatpush1.msra.mxu0 0.0
    %301 = vmatprep.subr.mxu0 0.0
    %302 = vmatpush1.msra.mxu0 0.0
    %303 = vmatprep.subr.mxu0 0.0
    %304 = vmatpush1.msra.mxu0 0.0
    %305 = vmatprep.subr.mxu0 0.0
    %306 = vmatpush1.msra.mxu0 0.0
    %307 = vmatprep.subr.mxu0 0.0
    %308 = vmatpush1.msra.mxu0 0.0
    %309 = vmatprep.subr.mxu0 0.0
    %310 = vmatpush1.msra.mxu0 0.0
    %311 = vmatprep.subr.mxu0 0.0
    %312 = vmatpush1.msra.mxu0 0.0
    %313 = vmatprep.subr.mxu0 0.0
    %314 = vmatpush1.msra.mxu0 0.0
    %315 = vmatprep.mubr.f32.mxu0 0.0
    %316 = vmatmul.mubr.f32.gmra.mrb[0].mxu0 %v249
    %v317 = vpop.f32.mrb[0].mxu0
    %v318 = vadd.f32 %v245, %v317
    %v319 = vpop.f32.mrb[0].mxu0
    %320 = vdwg.mxu0
    %v321 = vxor.u32 %v318, 2147483648
    %v322 = vmul.f32 %v321, 1.442695
    %v323 = vpow.pop %v322
    %v324 = vadd.f32 %v323, 1.0
    %v325 = vrcp.pop %v324
    %v326 = vmul.f32 1.0, %v325
    %v327 = vtanh.pop %v318
    %329 = vrot.lane.b32.xlu0 %v327, 64
    %v330 = vpop.permute.xlu0 %329
    %v332 = vmul.f32 %v326, %v330
    %v333 = vtanh.pop %v332
    %335 = vrot.lane.b32.xlu0 %v333, 96
    %v336 = vpop.permute.xlu0 %335
    %v338 = vmul.f32 %v326, %v336
    %s339 = scalar_lea.vmem [#allocation5], 96
    %v340 = vld [vmem:[%s339] sm:$0xff]
    %v341 = vld [vmem:[%s339 + $0x8] sm:$0xff]
    %v342 = vld [vmem:[%s339 + $0x10] sm:$0xff]
    %v343 = vld [vmem:[%s339 + $0x18] sm:$0xff]
    %s344 = scalar_lea.vmem %s2, 3
    %v345 = vld [vmem:[%s344] sm:$0x1]
    %347 = vrot.lane.b32.xlu0 %v338, 32
    %v348 = vpop.permute.xlu0 %347
    %v349 = vsel %vm47, %v348, 0
    %351 = vmatprep.subr.mxu0 0.0
    %352 = vmatpush1.msra.mxu0 %v340
    %353 = vmatprep.subr.mxu0 0.0
    %354 = vmatpush1.msra.mxu0 %v341
    %355 = vmatprep.subr.mxu0 0.0
    %356 = vmatpush1.msra.mxu0 %v342
    %357 = vmatprep.subr.mxu0 0.0
    %358 = vmatpush1.msra.mxu0 %v343
    %359 = vmatprep.subr.mxu0 0.0
    %360 = vmatpush1.msra.mxu0 0.0
    %361 = vmatprep.subr.mxu0 0.0
    %362 = vmatpush1.msra.mxu0 0.0
    %363 = vmatprep.subr.mxu0 0.0
    %364 = vmatpush1.msra.mxu0 0.0
    %365 = vmatprep.subr.mxu0 0.0
    %366 = vmatpush1.msra.mxu0 0.0
    %367 = vmatprep.subr.mxu0 0.0
    %368 = vmatpush1.msra.mxu0 0.0
    %369 = vmatprep.subr.mxu0 0.0
    %370 = vmatpush1.msra.mxu0 0.0
    %371 = vmatprep.subr.mxu0 0.0
    %372 = vmatpush1.msra.mxu0 0.0
    %373 = vmatprep.subr.mxu0 0.0
    %374 = vmatpush1.msra.mxu0 0.0
    %375 = vmatprep.subr.mxu0 0.0
    %376 = vmatpush1.msra.mxu0 0.0
    %377 = vmatprep.subr.mxu0 0.0
    %378 = vmatpush1.msra.mxu0 0.0
    %379 = vmatprep.subr.mxu0 0.0
    %380 = vmatpush1.msra.mxu0 0.0
    %381 = vmatprep.subr.mxu0 0.0
    %382 = vmatpush1.msra.mxu0 0.0
    %383 = vmatprep.subr.mxu0 0.0
    %384 = vmatpush1.msra.mxu0 0.0
    %385 = vmatprep.subr.mxu0 0.0
    %386 = vmatpush1.msra.mxu0 0.0
    %387 = vmatprep.subr.mxu0 0.0
    %388 = vmatpush1.msra.mxu0 0.0
    %389 = vmatprep.subr.mxu0 0.0
    %390 = vmatpush1.msra.mxu0 0.0
    %391 = vmatprep.subr.mxu0 0.0
    %392 = vmatpush1.msra.mxu0 0.0
    %393 = vmatprep.subr.mxu0 0.0
    %394 = vmatpush1.msra.mxu0 0.0
    %395 = vmatprep.subr.mxu0 0.0
    %396 = vmatpush1.msra.mxu0 0.0
    %397 = vmatprep.subr.mxu0 0.0
    %398 = vmatpush1.msra.mxu0 0.0
    %399 = vmatprep.subr.mxu0 0.0
    %400 = vmatpush1.msra.mxu0 0.0
    %401 = vmatprep.subr.mxu0 0.0
    %402 = vmatpush1.msra.mxu0 0.0
    %403 = vmatprep.subr.mxu0 0.0
    %404 = vmatpush1.msra.mxu0 0.0
    %405 = vmatprep.subr.mxu0 0.0
    %406 = vmatpush1.msra.mxu0 0.0
    %407 = vmatprep.subr.mxu0 0.0
    %408 = vmatpush1.msra.mxu0 0.0
    %409 = vmatprep.subr.mxu0 0.0
    %410 = vmatpush1.msra.mxu0 0.0
    %411 = vmatprep.subr.mxu0 0.0
    %412 = vmatpush1.msra.mxu0 0.0
    %413 = vmatprep.subr.mxu0 0.0
    %414 = vmatpush1.msra.mxu0 0.0
    %415 = vmatprep.mubr.f32.mxu0 0.0
    %416 = vmatmul.mubr.f32.gmra.mrb[0].mxu0 %v349
    %v417 = vpop.f32.mrb[0].mxu0
    %v418 = vadd.f32 %v345, %v417
    %v419 = vpop.f32.mrb[0].mxu0
    %420 = vdwg.mxu0
    %v421 = vxor.u32 %v418, 2147483648
    %v422 = vmul.f32 %v421, 1.442695
    %v423 = vpow.pop %v422
    %v424 = vadd.f32 %v423, 1.0
    %v425 = vrcp.pop %v424
    %v426 = vmul.f32 1.0, %v425
    %v427 = vtanh.pop %v418
    %429 = vrot.lane.b32.xlu0 %v427, 64
    %v430 = vpop.permute.xlu0 %429
    %v432 = vmul.f32 %v426, %v430
    %v433 = vtanh.pop %v432
    %435 = vrot.lane.b32.xlu0 %v433, 96
    %v436 = vpop.permute.xlu0 %435
    %v438 = vmul.f32 %v426, %v436
    %440 = vrot.lane.b32.xlu0 %v438, 32
    %v441 = vpop.permute.xlu0 %440
    %v443 = vsel %vm47, %v441, 0.0
    %444 = vst [vmem:[#allocation7] sm:$0x1] %v443
    // Predicated region
    $region22: #{tpu_custom_call.1} parent=1 // pred_check
      _
    $region23: #{tpu_custom_call.1} parent=1 // pred_check_branch
      %446 = sbr.rel (0) target = $region25
    $region24: #{tpu_custom_call.1} parent=1 // pred_region
      %s448 = ssub.s32 16, 16
      %449 = vsyncadd [#allocation4], %s448
      %s451 = sshll.u32 [#allocation7], 4
      %s452 = int_to_ptr.vmem [resolvable:$true] %s451
      %454 = dma.vmem_to_hbm [thread:$0]  %s452, 16, %s3, [#allocation4]
    $region25: #{tpu_custom_call.1} parent=1 // pred_fallthru
      _
    // Predicated region
    $region26: #{tpu_custom_call.1} parent=1 // pred_check
      _
    $region27: #{tpu_custom_call.1} parent=1 // pred_check_branch
      %456 = sbr.rel (0) target = $region29
    $region28: #{tpu_custom_call.1} parent=1 // pred_region
      %457 = dma.done [#allocation4], 16
    $region29: #{tpu_custom_call.1} parent=1 // pred_fallthru
      _
    %458 = vsyncpa [#allocation3], 1
    %459 = vsyncpa [#allocation6], 1
    %460 = vsyncpa [#allocation4], 1

</llo_original>
